<compile_context>
chip_gen: v7x
topology: tpu7x:2x2x1
jax: 0.10.0
libtpu: 0.0.40
codegen_flags: <defaults>
</compile_context>

<pallas_src>
import jax
import jax.numpy as jnp
import numpy as np
from jax.experimental import pallas as pl
from jax.experimental.pallas import tpu as pltpu

# ----- module hyper-parameters (small, deterministic) -----
L = 3      # rnn layers (2) + 1 for elmo-type layer stack
R = 2      # num_output_representations (one ScalarMix each)
B = 2      # batch
T = 8      # sequence length
D = 256    # bidirectional hidden size (forward D//2 | backward D//2)


def _mix_flip_kernel(gw_ref, len_ref, x_ref, *o_refs):
    """One grid step = `spb` whole sequences.

    gw_ref:  SMEM (R, L)          gamma * softmax(scalar_params)   (scalar prefetch)
    len_ref: SMEM (B,) int32      per-sequence valid lengths       (scalar prefetch)
    x_ref:   VMEM (L, spb, T, D)  raw (unmasked) layer outputs for these sequences
    o_refs:  R x VMEM (spb, T, D) output representations
    """
    Lx, S, Tx, Dfull = x_ref.shape
    Dh = Dfull // 2
    b0 = pl.program_id(0) * S                    # first sequence handled by this step

    # Load each layer slab from VMEM ONCE and reuse it for every representation
    # (upcast here so a bf16 upstream RNN halves HBM read traffic for free).
    xs = [x_ref[l].astype(jnp.float32) for l in range(Lx)]          # (S, T, D)

    # ScalarMix hot path: weighted sum over layers (gamma pre-folded into gw).
    accs = []
    for r in range(len(o_refs)):
        acc = gw_ref[r, 0] * xs[0]
        for l in range(1, Lx):                                      # L small & static
            acc = acc + gw_ref[r, l] * xs[l]                        # (S, T, D)
        accs.append(acc)

    row = jax.lax.broadcasted_iota(jnp.int32, (Tx, 1), 0)           # (T, 1)
    col = jax.lax.broadcasted_iota(jnp.int32, (Tx, Tx), 1)          # (T, T)

    for s in range(S):                                              # static per-seq loop
        length = len_ref[b0 + s]
        valid = row < length                                        # prefix mask
        m = valid.astype(jnp.float32)                               # (T, 1)
        # Per-sequence time reversal of the first `length` steps; pad rows map to self
        # and are zeroed by the mask folded into the permutation rows.
        flip = jnp.where(valid, length - 1 - row, row)              # (T, 1)
        perm = (col == flip).astype(jnp.float32) * m                # (T, T), mask folded

        for r in range(len(o_refs)):
            acc_s = accs[r][s]                                      # (T, D)
            # Backward half: exact selection on the MXU (precision pinned so the f32
            # multi-pass path is used and values are not rounded to bf16).
            bwd = jnp.dot(perm, acc_s[:, Dh:],
                          precision=jax.lax.Precision.HIGHEST,
                          preferred_element_type=jnp.float32)
            o_refs[r][s, :, :Dh] = acc_s[:, :Dh] * m
            o_refs[r][s, :, Dh:] = bwd                              # already masked


def weighted_sum_wrapper(layer_outputs, mask, scalar_params, gammas, *,
                         seqs_per_block=1):
    """JAX/Pallas equivalent of WeightedSumWrapper.forward (elmo path).

    layer_outputs: (L, B, T, D) float32 or bfloat16 -- output of rnn.get_all_layer_output
    mask:          (B, T) int32 (contiguous prefix of 1s per sequence)
    scalar_params: (R, L) float32 -- raw ScalarMix scalar parameters
    gammas:        (R,)   float32 -- ScalarMix gamma per representation
    returns: list of R arrays, each (B, T, D) float32
    """
    Lx, Bx, Tx, Dx = layer_outputs.shape
    Rx = scalar_params.shape[0]
    spb = seqs_per_block
    assert Bx % spb == 0, "batch must be divisible by seqs_per_block"

    # --- tiny scalar glue only (no full-tensor flip/concat materialization) ---
    lengths = mask.astype(jnp.int32).sum(axis=1)                         # (B,)
    # Fold gamma into the softmaxed ScalarMix weights (R*L scalars; free in glue).
    gw = gammas.astype(jnp.float32)[:, None] * jax.nn.softmax(
        scalar_params.astype(jnp.float32), axis=-1)                      # (R, L)

    outs = pl.pallas_call(
        _mix_flip_kernel,
        out_shape=tuple(jax.ShapeDtypeStruct((Bx, Tx, Dx), jnp.float32)
                        for _ in range(Rx)),
        grid_spec=pltpu.PrefetchScalarGridSpec(
            num_scalar_prefetch=2,             # gw, lengths -> SMEM
            grid=(Bx // spb,),                 # whole sequences per step, pipelined
            in_specs=[
                pl.BlockSpec((Lx, spb, Tx, Dx), lambda b, gw, ln: (0, b, 0, 0)),
            ],
            out_specs=tuple(pl.BlockSpec((spb, Tx, Dx), lambda b, gw, ln: (b, 0, 0))
                            for _ in range(Rx)),
        ),
        compiler_params=pltpu.CompilerParams(
            dimension_semantics=("parallel",),          # shards over v7x's 2 TCs
            vmem_limit_bytes=48 * 1024 * 1024),         # headroom under v7x 64 MiB
    )(gw, lengths, layer_outputs)

    # nn.Dropout(p=0.0) (and eval mode) is the identity -> nothing to do.
    return list(outs)


def _reference(layer_outputs, mask, scalar_params, gammas):
    """Pure-JAX reference mirroring the PyTorch op order."""
    mask_f = mask.astype(jnp.float32)
    masked = layer_outputs.astype(jnp.float32) * mask_f[None, :, :, None]
    lengths = mask.astype(jnp.int32).sum(axis=1)
    t_idx = jnp.arange(T, dtype=jnp.int32)
    flip_t = jnp.where(t_idx[None, :] < lengths[:, None],
                       lengths[:, None] - 1 - t_idx[None, :], t_idx[None, :])
    fwd = masked[..., : D // 2]
    bwd = masked[..., D // 2:]
    bwd = jnp.take_along_axis(
        bwd, jnp.broadcast_to(flip_t[None, :, :, None], bwd.shape), axis=2)
    masked = jnp.concatenate([fwd, bwd], axis=-1)
    w = jax.nn.softmax(scalar_params, axis=-1)
    reps = []
    for r in range(R):
        mix = gammas[r] * jnp.einsum('l,lbtd->btd', w[r], masked)
        reps.append(mix * mask_f[:, :, None])
    return reps


if __name__ == "__main__":
    key = jax.random.PRNGKey(0)
    k1, k2 = jax.random.split(key)

    layer_outputs = jax.random.normal(k1, (L, B, T, D), dtype=jnp.float32)
    # two sequences: one full length, one padded (length 5)
    lengths = jnp.array([T, 5], dtype=jnp.int32)
    mask = (jnp.arange(T, dtype=jnp.int32)[None, :] < lengths[:, None]).astype(jnp.int32)

    # ScalarMix parameters (deterministic): raw scalars + gamma per representation
    scalar_params = 0.1 * jax.random.normal(k2, (R, L), dtype=jnp.float32)
    gammas = jnp.array([1.0, 0.5], dtype=jnp.float32)

    reps = weighted_sum_wrapper(layer_outputs, mask, scalar_params, gammas)
    reps = [jax.block_until_ready(r) for r in reps]

    ref = _reference(layer_outputs, mask, scalar_params, gammas)
    for got, want in zip(reps, ref):
        np.testing.assert_allclose(np.asarray(got), np.asarray(want), rtol=1e-5, atol=1e-5)

    print("KERNEL_OK")
</pallas_src>

<mosaic_0001>
module attributes {stable_mosaic.version = 11 : i64} {
  func.func @_mix_flip_kernel(%arg0: i32, %arg1: memref<2x3xf32, #tpu.memory_space<smem>>, %arg2: memref<2xi32, #tpu.memory_space<smem>>, %arg3: memref<3x1x8x256xf32, #tpu.memory_space<vmem>>, %arg4: memref<1x8x256xf32, #tpu.memory_space<vmem>>, %arg5: memref<1x8x256xf32, #tpu.memory_space<vmem>>) attributes {dimension_semantics = [#tpu.dimension_semantics<parallel>], iteration_bounds = array<i64: 2>, scalar_prefetch = 2 : i64, scratch_operands = 0 : i64, tpu.core_type = #tpu.core_type<tc>, window_params = [{transform_indices = @transform_0, window_bounds = array<i64: 3, 1, 8, 256>}, {transform_indices = @transform_1, window_bounds = array<i64: 1, 8, 256>}, {transform_indices = @transform_2, window_bounds = array<i64: 1, 8, 256>}]} {
    %c1_i32 = arith.constant 1 : i32
    %0 = arith.muli %arg0, %c1_i32 : i32
    %c0 = arith.constant 0 : index
    %c0_0 = arith.constant 0 : index
    %c0_1 = arith.constant 0 : index
    %c0_2 = arith.constant 0 : index
    %1 = vector.load %arg3[%c0, %c0_0, %c0_1, %c0_2] : memref<3x1x8x256xf32, #tpu.memory_space<vmem>>, vector<1x1x8x256xf32>
    %2 = vector.shape_cast %1 : vector<1x1x8x256xf32> to vector<1x8x256xf32>
    %c1 = arith.constant 1 : index
    %c0_3 = arith.constant 0 : index
    %c0_4 = arith.constant 0 : index
    %c0_5 = arith.constant 0 : index
    %3 = vector.load %arg3[%c1, %c0_3, %c0_4, %c0_5] : memref<3x1x8x256xf32, #tpu.memory_space<vmem>>, vector<1x1x8x256xf32>
    %4 = vector.shape_cast %3 : vector<1x1x8x256xf32> to vector<1x8x256xf32>
    %c2 = arith.constant 2 : index
    %c0_6 = arith.constant 0 : index
    %c0_7 = arith.constant 0 : index
    %c0_8 = arith.constant 0 : index
    %5 = vector.load %arg3[%c2, %c0_6, %c0_7, %c0_8] : memref<3x1x8x256xf32, #tpu.memory_space<vmem>>, vector<1x1x8x256xf32>
    %6 = vector.shape_cast %5 : vector<1x1x8x256xf32> to vector<1x8x256xf32>
    %c0_9 = arith.constant 0 : index
    %c0_10 = arith.constant 0 : index
    %7 = memref.load %arg1[%c0_9, %c0_10] : memref<2x3xf32, #tpu.memory_space<smem>>
    %8 = vector.broadcast %7 : f32 to vector<1x8x256xf32>
    %9 = arith.mulf %8, %2 : vector<1x8x256xf32>
    %c0_11 = arith.constant 0 : index
    %c1_12 = arith.constant 1 : index
    %10 = memref.load %arg1[%c0_11, %c1_12] : memref<2x3xf32, #tpu.memory_space<smem>>
    %11 = vector.broadcast %10 : f32 to vector<1x8x256xf32>
    %12 = arith.mulf %11, %4 : vector<1x8x256xf32>
    %13 = arith.addf %9, %12 : vector<1x8x256xf32>
    %c0_13 = arith.constant 0 : index
    %c2_14 = arith.constant 2 : index
    %14 = memref.load %arg1[%c0_13, %c2_14] : memref<2x3xf32, #tpu.memory_space<smem>>
    %15 = vector.broadcast %14 : f32 to vector<1x8x256xf32>
    %16 = arith.mulf %15, %6 : vector<1x8x256xf32>
    %17 = arith.addf %13, %16 : vector<1x8x256xf32>
    %c1_15 = arith.constant 1 : index
    %c0_16 = arith.constant 0 : index
    %18 = memref.load %arg1[%c1_15, %c0_16] : memref<2x3xf32, #tpu.memory_space<smem>>
    %19 = vector.broadcast %18 : f32 to vector<1x8x256xf32>
    %20 = arith.mulf %19, %2 : vector<1x8x256xf32>
    %c1_17 = arith.constant 1 : index
    %c1_18 = arith.constant 1 : index
    %21 = memref.load %arg1[%c1_17, %c1_18] : memref<2x3xf32, #tpu.memory_space<smem>>
    %22 = vector.broadcast %21 : f32 to vector<1x8x256xf32>
    %23 = arith.mulf %22, %4 : vector<1x8x256xf32>
    %24 = arith.addf %20, %23 : vector<1x8x256xf32>
    %c1_19 = arith.constant 1 : index
    %c2_20 = arith.constant 2 : index
    %25 = memref.load %arg1[%c1_19, %c2_20] : memref<2x3xf32, #tpu.memory_space<smem>>
    %26 = vector.broadcast %25 : f32 to vector<1x8x256xf32>
    %27 = arith.mulf %26, %6 : vector<1x8x256xf32>
    %28 = arith.addf %24, %27 : vector<1x8x256xf32>
    %29 = tpu.iota {dimensions = array<i32: 0>} : vector<8x1xi32>
    %30 = tpu.iota {dimensions = array<i32: 1>} : vector<8x8xi32>
    %c0_i32 = arith.constant 0 : i32
    %31 = arith.addi %0, %c0_i32 : i32
    %32 = arith.index_cast %31 : i32 to index
    %33 = memref.load %arg2[%32] : memref<2xi32, #tpu.memory_space<smem>>
    %34 = vector.broadcast %33 : i32 to vector<8x1xi32>
    %35 = arith.cmpi slt, %29, %34 : vector<8x1xi32>
    %36 = arith.extui %35 : vector<8x1xi1> to vector<8x1xi32>
    %37 = arith.sitofp %36 : vector<8x1xi32> to vector<8x1xf32>
    %c1_i32_21 = arith.constant 1 : i32
    %38 = arith.subi %33, %c1_i32_21 : i32
    %39 = vector.broadcast %38 : i32 to vector<8x1xi32>
    %40 = arith.subi %39, %29 : vector<8x1xi32>
    %41 = arith.select %35, %40, %29 : vector<8x1xi1>, vector<8x1xi32>
    %42 = vector.broadcast %41 : vector<8x1xi32> to vector<8x8xi32>
    %43 = arith.cmpi eq, %30, %42 : vector<8x8xi32>
    %44 = arith.extui %43 : vector<8x8xi1> to vector<8x8xi32>
    %45 = arith.sitofp %44 : vector<8x8xi32> to vector<8x8xf32>
    %46 = vector.broadcast %37 : vector<8x1xf32> to vector<8x8xf32>
    %47 = arith.mulf %45, %46 : vector<8x8xf32>
    %48 = vector.shape_cast %17 : vector<1x8x256xf32> to vector<8x256xf32>
    %49 = vector.extract_strided_slice %48 {offsets = [0, 128], sizes = [8, 128], strides = [1, 1]} : vector<8x256xf32> to vector<8x128xf32>
    %cst = arith.constant dense<0.000000e+00> : vector<8x128xf32>
    %50 = tpu.matmul %47, %49, %cst {dimension_numbers = #tpu.dot_dimension_numbers<[1], [0], [0], [1], [0, 0, 1, 1], [], []>, precision = #tpu.contract_precision<fp32>} : vector<8x8xf32>, vector<8x128xf32>, vector<8x128xf32> -> vector<8x128xf32>
    %51 = vector.extract_strided_slice %48 {offsets = [0, 0], sizes = [8, 128], strides = [1, 1]} : vector<8x256xf32> to vector<8x128xf32>
    %52 = vector.broadcast %37 : vector<8x1xf32> to vector<8x128xf32>
    %53 = arith.mulf %51, %52 : vector<8x128xf32>
    %c0_22 = arith.constant 0 : index
    %c0_23 = arith.constant 0 : index
    %c0_24 = arith.constant 0 : index
    %54 = vector.load %arg4[%c0_22, %c0_23, %c0_24] : memref<1x8x256xf32, #tpu.memory_space<vmem>>, vector<1x8x128xf32>
    %55 = vector.shape_cast %54 : vector<1x8x128xf32> to vector<8x128xf32>
    %56 = vector.shape_cast %53 : vector<8x128xf32> to vector<1x8x128xf32>
    tpu.vector_store %arg4[%c0_22, %c0_23, %c0_24], %56 {strides = array<i32>} : memref<1x8x256xf32, #tpu.memory_space<vmem>>, vector<1x8x128xf32>,
    %c0_25 = arith.constant 0 : index
    %c0_26 = arith.constant 0 : index
    %c128 = arith.constant 128 : index
    %57 = vector.load %arg4[%c0_25, %c0_26, %c128] : memref<1x8x256xf32, #tpu.memory_space<vmem>>, vector<1x8x128xf32>
    %58 = vector.shape_cast %57 : vector<1x8x128xf32> to vector<8x128xf32>
    %59 = vector.shape_cast %50 : vector<8x128xf32> to vector<1x8x128xf32>
    tpu.vector_store %arg4[%c0_25, %c0_26, %c128], %59 {strides = array<i32>} : memref<1x8x256xf32, #tpu.memory_space<vmem>>, vector<1x8x128xf32>,
    %60 = vector.shape_cast %28 : vector<1x8x256xf32> to vector<8x256xf32>
    %61 = vector.extract_strided_slice %60 {offsets = [0, 128], sizes = [8, 128], strides = [1, 1]} : vector<8x256xf32> to vector<8x128xf32>
    %cst_27 = arith.constant dense<0.000000e+00> : vector<8x128xf32>
    %62 = tpu.matmul %47, %61, %cst_27 {dimension_numbers = #tpu.dot_dimension_numbers<[1], [0], [0], [1], [0, 0, 1, 1], [], []>, precision = #tpu.contract_precision<fp32>} : vector<8x8xf32>, vector<8x128xf32>, vector<8x128xf32> -> vector<8x128xf32>
    %63 = vector.extract_strided_slice %60 {offsets = [0, 0], sizes = [8, 128], strides = [1, 1]} : vector<8x256xf32> to vector<8x128xf32>
    %64 = vector.broadcast %37 : vector<8x1xf32> to vector<8x128xf32>
    %65 = arith.mulf %63, %64 : vector<8x128xf32>
    %c0_28 = arith.constant 0 : index
    %c0_29 = arith.constant 0 : index
    %c0_30 = arith.constant 0 : index
    %66 = vector.load %arg5[%c0_28, %c0_29, %c0_30] : memref<1x8x256xf32, #tpu.memory_space<vmem>>, vector<1x8x128xf32>
    %67 = vector.shape_cast %66 : vector<1x8x128xf32> to vector<8x128xf32>
    %68 = vector.shape_cast %65 : vector<8x128xf32> to vector<1x8x128xf32>
    tpu.vector_store %arg5[%c0_28, %c0_29, %c0_30], %68 {strides = array<i32>} : memref<1x8x256xf32, #tpu.memory_space<vmem>>, vector<1x8x128xf32>,
    %c0_31 = arith.constant 0 : index
    %c0_32 = arith.constant 0 : index
    %c128_33 = arith.constant 128 : index
    %69 = vector.load %arg5[%c0_31, %c0_32, %c128_33] : memref<1x8x256xf32, #tpu.memory_space<vmem>>, vector<1x8x128xf32>
    %70 = vector.shape_cast %69 : vector<1x8x128xf32> to vector<8x128xf32>
    %71 = vector.shape_cast %62 : vector<8x128xf32> to vector<1x8x128xf32>
    tpu.vector_store %arg5[%c0_31, %c0_32, %c128_33], %71 {strides = array<i32>} : memref<1x8x256xf32, #tpu.memory_space<vmem>>, vector<1x8x128xf32>,
    return
  }
  func.func @transform_0(%arg0: i32, %arg1: memref<2x3xf32, #tpu.memory_space<smem>>, %arg2: memref<2xi32, #tpu.memory_space<smem>>) -> (i32, i32, i32, i32) {
    %c0_i32 = arith.constant 0 : i32
    %c0_i32_0 = arith.constant 0 : i32
    %c0_i32_1 = arith.constant 0 : i32
    %c0_i32_2 = arith.constant 0 : i32
    return %c0_i32, %arg0, %c0_i32_0, %c0_i32_1 : i32, i32, i32, i32
  }
  func.func @transform_1(%arg0: i32, %arg1: memref<2x3xf32, #tpu.memory_space<smem>>, %arg2: memref<2xi32, #tpu.memory_space<smem>>) -> (i32, i32, i32) {
    %c0_i32 = arith.constant 0 : i32
    %c0_i32_0 = arith.constant 0 : i32
    %c0_i32_1 = arith.constant 0 : i32
    return %arg0, %c0_i32, %c0_i32_0 : i32, i32, i32
  }
  func.func @transform_2(%arg0: i32, %arg1: memref<2x3xf32, #tpu.memory_space<smem>>, %arg2: memref<2xi32, #tpu.memory_space<smem>>) -> (i32, i32, i32) {
    %c0_i32 = arith.constant 0 : i32
    %c0_i32_0 = arith.constant 0 : i32
    %c0_i32_1 = arith.constant 0 : i32
    return %arg0, %c0_i32, %c0_i32_0 : i32, i32, i32
  }
}

</mosaic_0001>

<llo_original>
// kernel: tpu_custom_call.1
$region0: #{tpu_custom_call.1}
  #allocation0 [shape = 'u32[]', space=smem, size = 0x4, offset = 0x4, fixed_abs, tag = 'smem constant byte address 0x4 - core index']
  #allocation1 [shape = 'u32[144,128]{1,0:T(1,128)}', space=vmem, size = 0x12000, scoped, tag = 'internal scratch']
  #allocation2 [shape = 's32[1]{0}', space=sflag, size = 0x4, scoped, tag = 'scoped memory for tpu_custom_call.1']
  #allocation3 [shape = 'u8[1024]{0}', space=smem, size = 0x400, scoped, tag = 'prefetched SMEM operand 0']
  #allocation4 [shape = 'u8[512]{0}', space=smem, size = 0x200, scoped, tag = 'prefetched SMEM operand 1']
  %s0 = inlined_call_operand.hbm [shape: f32[2,3], index: 0, kind: input, shape index: {}]
  %s1 = inlined_call_operand.vmem [shape: s32[2], index: 1, kind: input, shape index: {}]
  %s2 = inlined_call_operand.hbm [shape: f32[3,2,8,256], index: 2, kind: input, shape index: {}]
  %s3 = inlined_call_operand.hbm [shape: f32[2,8,256], index: 3, kind: output, shape index: {0}]
  %s4 = inlined_call_operand.hbm [shape: f32[2,8,256], index: 4, kind: output, shape index: {1}]
  %5 = xla_tuple %s3, %s4
  %s6 = sld [smem:[#allocation0]]
  $region49: #{tpu_custom_call.1} parent=0
    _
  %s8 = ssub.s32 1, %s6
  %s9 = scalar_select 0, %s8, %s6
  %11 = dma.hbm_to_smem %s0, 32, [#allocation3], [#allocation2]
  %s12 = sshll.u32 %s1, 4
  %s13 = int_to_ptr.vmem [resolvable:$true] %s12
  %15 = dma.vmem_to_smem %s13, 16, [#allocation4], [#allocation2]
  %16 = dma.done [#allocation2], 48
  %17 = sfence
  $region1: #{tpu_custom_call.1} parent=0
    #allocation5 [shape = 'u8[49152]{0}', space=vmem, size = 0xc000, scoped, tag = 'input window, operand 2']
    #allocation6 [shape = 's32[2]{0}', space=sflag, size = 0x8, scoped, tag = 'scoped memory for tpu_custom_call.1']
    #allocation7 [shape = 's32[2]{0}', space=sflag, size = 0x8, scoped, tag = 'scoped memory for tpu_custom_call.1']
    #allocation8 [shape = 'u8[16384]{0}', space=vmem, size = 0x4000, scoped, tag = 'output window, operand 0']
    #allocation9 [shape = 'u8[16384]{0}', space=vmem, size = 0x4000, scoped, tag = 'output window, operand 1']
    #allocation10 [shape = 's32[2]{0}', space=sflag, size = 0x8, scoped, tag = 'scoped memory for tpu_custom_call.1']
    %18 = vsyncpa [#allocation6], 0
    %s19 = scalar_lea.sflag [#allocation6], 1
    %20 = vsyncpa %s19, 0
    %21 = vsyncpa [#allocation7], 0
    %s22 = scalar_lea.sflag [#allocation7], 1
    %23 = vsyncpa %s22, 0
    %24 = vsyncpa [#allocation10], 0
    %s25 = scalar_lea.sflag [#allocation10], 1
    %26 = vsyncpa %s25, 0
    loop: start=0, step=1, limit=4
    $region2: #{tpu_custom_call.1} parent=1 // loop_pre_header
      _
    $region3: #{tpu_custom_call.1} parent=1 // loop_header
      %s28 = sphi 0, %s32
      %p29 = scmp.ge.s32.totalorder %s28, 4
      %s38 = sphi 0, %s40
      %s41 = sphi 0, %s38
      %s42 = sphi 0, %s41
      %s58 = sphi 0, %s42
      %s64 = sphi 0, %s66
      %s67 = sphi 0, %s64
      %s68 = sphi 0, %s67
      %s84 = sphi 0, %s68
      %s90 = sphi 0, %s92
      %s93 = sphi 0, %s90
      %s94 = sphi 0, %s93
      %s110 = sphi 0, %s94
    $region4: #{tpu_custom_call.1} parent=1 // loop_header_branch
      %31 = sbr.rel (%p29) target = $region8
    $region5: #{tpu_custom_call.1} parent=1 // loop_body
      %s33 = ssub.s32 %s28, 1
      %s34 = ssub.s32 %s28, 2
      %s35 = sadd.s32 %s28, 1
      %s36 = ssub.s32 %s28, %s35
      %p37 = scmp.eq.s32.totalorder %s36, 0
      %s39 = sadd.s32 %s38, 1
      %s40 = scalar_select %p37, %s38, %s39
      %p43 = pneg %p37
      %p44 = scmp.eq.s32.totalorder %s28, 1
      %p45 = por %p43, %p44
      %p46 = scmp.ne.s32.totalorder %s38, %s41
      %p47 = scmp.eq.s32.totalorder %s28, 0
      %p48 = por %p46, %p47
      %p49 = scmp.ne.s32.totalorder %s38, %s41
      %p50 = scmp.eq.s32.totalorder %s33, 1
      %p51 = por %p49, %p50
      %p52 = scmp.ne.s32.totalorder %s41, %s42
      %p53 = scmp.eq.s32.totalorder %s33, 0
      %p54 = por %p52, %p53
      %p55 = scmp.ne.s32.totalorder %s41, %s42
      %p56 = scmp.eq.s32.totalorder %s34, 1
      %p57 = por %p55, %p56
      %p59 = scmp.ne.s32.totalorder %s42, %s58
      %p60 = scmp.eq.s32.totalorder %s34, 0
      %p61 = por %p59, %p60
      %s62 = ssub.s32 %s28, %s35
      %p63 = scmp.eq.s32.totalorder %s62, 0
      %s65 = sadd.s32 %s64, 1
      %s66 = scalar_select %p63, %s64, %s65
      %p69 = pneg %p63
      %p70 = scmp.eq.s32.totalorder %s28, 1
      %p71 = por %p69, %p70
      %p72 = scmp.ne.s32.totalorder %s64, %s67
      %p73 = scmp.eq.s32.totalorder %s28, 0
      %p74 = por %p72, %p73
      %p75 = scmp.ne.s32.totalorder %s64, %s67
      %p76 = scmp.eq.s32.totalorder %s33, 1
      %p77 = por %p75, %p76
      %p78 = scmp.ne.s32.totalorder %s67, %s68
      %p79 = scmp.eq.s32.totalorder %s33, 0
      %p80 = por %p78, %p79
      %p81 = scmp.ne.s32.totalorder %s67, %s68
      %p82 = scmp.eq.s32.totalorder %s34, 1
      %p83 = por %p81, %p82
      %p85 = scmp.ne.s32.totalorder %s68, %s84
      %p86 = scmp.eq.s32.totalorder %s34, 0
      %p87 = por %p85, %p86
      %s88 = ssub.s32 %s28, %s35
      %p89 = scmp.eq.s32.totalorder %s88, 0
      %s91 = sadd.s32 %s90, 1
      %s92 = scalar_select %p89, %s90, %s91
      %p95 = pneg %p89
      %p96 = scmp.eq.s32.totalorder %s28, 1
      %p97 = por %p95, %p96
      %p98 = scmp.ne.s32.totalorder %s90, %s93
      %p99 = scmp.eq.s32.totalorder %s28, 0
      %p100 = por %p98, %p99
      %p101 = scmp.ne.s32.totalorder %s90, %s93
      %p102 = scmp.eq.s32.totalorder %s33, 1
      %p103 = por %p101, %p102
      %p104 = scmp.ne.s32.totalorder %s93, %s94
      %p105 = scmp.eq.s32.totalorder %s33, 0
      %p106 = por %p104, %p105
      %p107 = scmp.ne.s32.totalorder %s93, %s94
      %p108 = scmp.eq.s32.totalorder %s34, 1
      %p109 = por %p107, %p108
      %p111 = scmp.ne.s32.totalorder %s94, %s110
      %p112 = scmp.eq.s32.totalorder %s34, 0
      %p113 = por %p111, %p112
      %p114 = scmp.le.s32.totalorder 1, %s28
      %p115 = scmp.lt.s32.totalorder %s28, 3
      %p116 = pnand %p114, %p115
      %p117 = pneg %p116
      // Predicated region
      $region9: #{tpu_custom_call.1} parent=5 // pred_check
        _
      $region10: #{tpu_custom_call.1} parent=5 // pred_check_branch
        %119 = sbr.rel (%p116) target = $region12
      $region11: #{tpu_custom_call.1} parent=5 // pred_region
        %s120 = ssub.s32 %s28, 1
      $region12: #{tpu_custom_call.1} parent=5 // pred_fallthru
        _
      %p121 = scmp.lt.s32.totalorder %s28, 2
      // Predicated region
      $region13: #{tpu_custom_call.1} parent=5 // pred_check
        %p122 = pneg %p121
      $region14: #{tpu_custom_call.1} parent=5 // pred_check_branch
        %124 = sbr.rel (%p122) target = $region16
      $region15: #{tpu_custom_call.1} parent=5 // pred_region
        // Predicated region
        $region17: #{tpu_custom_call.1} parent=15 // pred_check
          %p125 = pneg %p48
        $region18: #{tpu_custom_call.1} parent=15 // pred_check_branch
          %127 = sbr.rel (%p125) target = $region20
        $region19: #{tpu_custom_call.1} parent=15 // pred_region
          %s128 = sand.u32 %s38, 1
          %s129 = scalar_lea.sflag [#allocation6], %s128
          %s130 = sand.u32 %s38, 1
          %s131 = smul.addr %s130, 48
          %s132 = scalar_lea.vmem [#allocation5], %s131
          %s134 = ssub.s32 768, 768
          %135 = vsyncadd %s129, %s134
          %s136 = smul.addr %s28, 2
          %s137 = smul.addr %s136, 128
          %s138 = scalar_lea.hbm %s2, %s137
          %s139 = sshll.u32 %s132, 4
          %s140 = int_to_ptr.vmem [resolvable:$true] %s139
          %145 = dma.hbm_to_vmem [thread:$0]  %s138, 768, %s140, %s129, 512, 256, 16
        $region20: #{tpu_custom_call.1} parent=15 // pred_fallthru
          _
      $region16: #{tpu_custom_call.1} parent=5 // pred_fallthru
        _
      %p146 = scmp.le.s32.totalorder 1, %s28
      %p147 = scmp.lt.s32.totalorder %s28, 3
      %p148 = pnand %p146, %p147
      %p149 = pneg %p148
      // Predicated region
      $region21: #{tpu_custom_call.1} parent=5 // pred_check
        _
      $region22: #{tpu_custom_call.1} parent=5 // pred_check_branch
        %151 = sbr.rel (%p148) target = $region24
      $region23: #{tpu_custom_call.1} parent=5 // pred_region
        %s152 = ssub.s32 %s28, 1
        %s153 = sand.u32 %s41, 1
        %s154 = scalar_lea.sflag [#allocation6], %s153
        %s155 = sand.u32 %s41, 1
        %s156 = smul.addr %s155, 48
        %s157 = scalar_lea.vmem [#allocation5], %s156
        // Predicated region
        $region25: #{tpu_custom_call.1} parent=23 // pred_check
          %p158 = pneg %p54
        $region26: #{tpu_custom_call.1} parent=23 // pred_check_branch
          %160 = sbr.rel (%p158) target = $region28
        $region27: #{tpu_custom_call.1} parent=23 // pred_region
          %161 = dma.done %s154, 768
        $region28: #{tpu_custom_call.1} parent=23 // pred_fallthru
          _
        %s162 = sand.u32 %s41, 1
        %s163 = scalar_lea.sflag [#allocation6], %s162
        %s164 = sand.u32 %s41, 1
        %s165 = smul.addr %s164, 48
        %s166 = scalar_lea.vmem [#allocation5], %s165
        %p167 = pneg %p54
        %p168 = pneg %p51
        %p169 = pneg %p80
        %p170 = pneg %p77
        %s171 = sand.u32 %s67, 1
        %s172 = scalar_lea.sflag [#allocation7], %s171
        %s173 = sand.u32 %s67, 1
        %s174 = smul.addr %s173, 16
        %s175 = scalar_lea.vmem [#allocation8], %s174
        %p176 = pneg %p106
        %p177 = pneg %p103
        %s178 = sand.u32 %s93, 1
        %s179 = scalar_lea.sflag [#allocation10], %s178
        %s180 = sand.u32 %s93, 1
        %s181 = smul.addr %s180, 16
        %s182 = scalar_lea.vmem [#allocation9], %s181
        %v183 = vld [vmem:[%s157] sm:$0xff]
        %v184 = vld [vmem:[%s157 + $0x8] sm:$0xff]
        %s185 = scalar_lea.vmem %s157, 16 [#allocation5]
        %v186 = vld [vmem:[%s185] sm:$0xff]
        %v187 = vld [vmem:[%s185 + $0x8] sm:$0xff]
        %s188 = scalar_lea.vmem %s157, 32 [#allocation5]
        %v189 = vld [vmem:[%s188] sm:$0xff]
        %v190 = vld [vmem:[%s188 + $0x8] sm:$0xff]
        %s191 = sld [smem:[#allocation3]]
        %v192 = vstv %s191
        %v193 = vmul.f32 %v192, %v183
        %v194 = vmul.f32 %v192, %v184
        %s195 = sld [smem:[#allocation3 + $0x1]]
        %v196 = vstv %s195
        %v197 = vmul.f32 %v196, %v186
        %v198 = vmul.f32 %v196, %v187
        %v199 = vadd.f32 %v193, %v197
        %v200 = vadd.f32 %v194, %v198
        %s201 = sld [smem:[#allocation3 + $0x2]]
        %v202 = vstv %s201
        %v203 = vmul.f32 %v202, %v189
        %v204 = vmul.f32 %v202, %v190
        %v205 = vadd.f32 %v199, %v203
        %v206 = vadd.f32 %v200, %v204
        %s207 = sld [smem:[#allocation3 + $0x80]]
        %v208 = vstv %s207
        %v209 = vmul.f32 %v208, %v183
        %v210 = vmul.f32 %v208, %v184
        %s211 = sld [smem:[#allocation3 + $0x81]]
        %v212 = vstv %s211
        %v213 = vmul.f32 %v212, %v186
        %v214 = vmul.f32 %v212, %v187
        %v215 = vadd.f32 %v209, %v213
        %v216 = vadd.f32 %v210, %v214
        %s217 = sld [smem:[#allocation3 + $0x82]]
        %v218 = vstv %s217
        %v219 = vmul.f32 %v218, %v189
        %v220 = vmul.f32 %v218, %v190
        %v221 = vadd.f32 %v215, %v219
        %v222 = vadd.f32 %v216, %v220
        %v223 = vlaneseq
        %v224 = vshrl.u32 %v223, 7
        %v225 = vlaneseq
        %v226 = vand.u32 %v225, 127
        %s227 = sld [smem:[#allocation4 + %s33]]
        %v228 = vstv %s227
        %vm229 = vcmp.lt.s32.totalorder %v224, %v228
        %v230 = vsel %vm229, 1, 0
        %v231 = vcvt.s32.f32 %v230
        %s232 = ssub.s32 %s227, 1
        %v233 = vstv %s232
        %v234 = vsub.s32 %v233, %v224
        %v235 = vsel %vm229, %v234, %v224
        %vm236 = vcmp.eq.s32.totalorder %v226, %v235
        %v237 = vsel %vm236, 1, 0
        %v238 = vcvt.s32.f32 %v237
        %v239 = vmul.f32 %v238, %v231
        %vm240 = vcmask 64512
        %v242 = vsel %vm240, %v239, 0
        %244 = vmatprep.subr.mxu0 0.0
        %v245 = vand.u32 %v206, 4294901760
        %246 = vmatpush1.msra.mxu0 %v245
        %247 = vmatprep.subr.mxu0 0.0
        %248 = vmatpush1.msra.mxu0 0.0
        %249 = vmatprep.subr.mxu0 0.0
        %250 = vmatpush1.msra.mxu0 0.0
        %251 = vmatprep.subr.mxu0 0.0
        %252 = vmatpush1.msra.mxu0 0.0
        %253 = vmatprep.subr.mxu0 0.0
        %254 = vmatpush1.msra.mxu0 0.0
        %255 = vmatprep.subr.mxu0 0.0
        %256 = vmatpush1.msra.mxu0 0.0
        %257 = vmatprep.subr.mxu0 0.0
        %258 = vmatpush1.msra.mxu0 0.0
        %259 = vmatprep.subr.mxu0 0.0
        %260 = vmatpush1.msra.mxu0 0.0
        %261 = vmatprep.subr.mxu0 0.0
        %262 = vmatpush1.msra.mxu0 0.0
        %263 = vmatprep.subr.mxu0 0.0
        %264 = vmatpush1.msra.mxu0 0.0
        %265 = vmatprep.subr.mxu0 0.0
        %266 = vmatpush1.msra.mxu0 0.0
        %267 = vmatprep.subr.mxu0 0.0
        %268 = vmatpush1.msra.mxu0 0.0
        %269 = vmatprep.subr.mxu0 0.0
        %270 = vmatpush1.msra.mxu0 0.0
        %271 = vmatprep.subr.mxu0 0.0
        %272 = vmatpush1.msra.mxu0 0.0
        %273 = vmatprep.subr.mxu0 0.0
        %274 = vmatpush1.msra.mxu0 0.0
        %275 = vmatprep.subr.mxu0 0.0
        %276 = vmatpush1.msra.mxu0 0.0
        %277 = vmatprep.subr.mxu0 0.0
        %278 = vmatpush1.msra.mxu0 0.0
        %279 = vmatprep.subr.mxu0 0.0
        %280 = vmatpush1.msra.mxu0 0.0
        %281 = vmatprep.subr.mxu0 0.0
        %282 = vmatpush1.msra.mxu0 0.0
        %283 = vmatprep.subr.mxu0 0.0
        %284 = vmatpush1.msra.mxu0 0.0
        %285 = vmatprep.subr.mxu0 0.0
        %286 = vmatpush1.msra.mxu0 0.0
        %287 = vmatprep.subr.mxu0 0.0
        %288 = vmatpush1.msra.mxu0 0.0
        %289 = vmatprep.subr.mxu0 0.0
        %290 = vmatpush1.msra.mxu0 0.0
        %291 = vmatprep.subr.mxu0 0.0
        %292 = vmatpush1.msra.mxu0 0.0
        %293 = vmatprep.subr.mxu0 0.0
        %294 = vmatpush1.msra.mxu0 0.0
        %295 = vmatprep.subr.mxu0 0.0
        %296 = vmatpush1.msra.mxu0 0.0
        %297 = vmatprep.subr.mxu0 0.0
        %298 = vmatpush1.msra.mxu0 0.0
        %299 = vmatprep.subr.mxu0 0.0
        %300 = vmatpush1.msra.mxu0 0.0
        %301 = vmatprep.subr.mxu0 0.0
        %302 = vmatpush1.msra.mxu0 0.0
        %303 = vmatprep.subr.mxu0 0.0
        %304 = vmatpush1.msra.mxu0 0.0
        %305 = vmatprep.subr.mxu0 0.0
        %306 = vmatpush1.msra.mxu0 0.0
        %307 = vmatprep.subr.mxu0 0.0
        %308 = vmatpush1.msra.mxu0 0.0
        %309 = vmatprep.mubr.f32.mxu0 0.0
        %v310 = vand.u32 %v242, 4294901760
        %v311 = vsub.f32 %v242, %v310
        %v312 = vand.u32 %v311, 4294901760
        %v313 = vsub.f32 %v311, %v312
        %v314 = vand.u32 %v313, 4294901760
        %315 = vmatmul.mubr.f32.gmra.mrb[0].mxu0 %v314
        %v316 = vpop.f32.mrb[0].mxu0
        %v317 = vadd.f32 0.0, %v316
        %v318 = vpop.f32.mrb[0].mxu0
        %319 = vdwg.mxu0
        %320 = vmatprep.subr.mxu0 0.0
        %v321 = vand.u32 %v206, 4294901760
        %v322 = vsub.f32 %v206, %v321
        %v323 = vand.u32 %v322, 4294901760
        %v324 = vsub.f32 %v322, %v323
        %v325 = vand.u32 %v324, 4294901760
        %326 = vmatpush1.msra.mxu0 %v325
        %327 = vmatprep.subr.mxu0 0.0
        %328 = vmatpush1.msra.mxu0 0.0
        %329 = vmatprep.subr.mxu0 0.0
        %330 = vmatpush1.msra.mxu0 0.0
        %331 = vmatprep.subr.mxu0 0.0
        %332 = vmatpush1.msra.mxu0 0.0
        %333 = vmatprep.subr.mxu0 0.0
        %334 = vmatpush1.msra.mxu0 0.0
        %335 = vmatprep.subr.mxu0 0.0
        %336 = vmatpush1.msra.mxu0 0.0
        %337 = vmatprep.subr.mxu0 0.0
        %338 = vmatpush1.msra.mxu0 0.0
        %339 = vmatprep.subr.mxu0 0.0
        %340 = vmatpush1.msra.mxu0 0.0
        %341 = vmatprep.subr.mxu0 0.0
        %342 = vmatpush1.msra.mxu0 0.0
        %343 = vmatprep.subr.mxu0 0.0
        %344 = vmatpush1.msra.mxu0 0.0
        %345 = vmatprep.subr.mxu0 0.0
        %346 = vmatpush1.msra.mxu0 0.0
        %347 = vmatprep.subr.mxu0 0.0
        %348 = vmatpush1.msra.mxu0 0.0
        %349 = vmatprep.subr.mxu0 0.0
        %350 = vmatpush1.msra.mxu0 0.0
        %351 = vmatprep.subr.mxu0 0.0
        %352 = vmatpush1.msra.mxu0 0.0
        %353 = vmatprep.subr.mxu0 0.0
        %354 = vmatpush1.msra.mxu0 0.0
        %355 = vmatprep.subr.mxu0 0.0
        %356 = vmatpush1.msra.mxu0 0.0
        %357 = vmatprep.subr.mxu0 0.0
        %358 = vmatpush1.msra.mxu0 0.0
        %359 = vmatprep.subr.mxu0 0.0
        %360 = vmatpush1.msra.mxu0 0.0
        %361 = vmatprep.subr.mxu0 0.0
        %362 = vmatpush1.msra.mxu0 0.0
        %363 = vmatprep.subr.mxu0 0.0
        %364 = vmatpush1.msra.mxu0 0.0
        %365 = vmatprep.subr.mxu0 0.0
        %366 = vmatpush1.msra.mxu0 0.0
        %367 = vmatprep.subr.mxu0 0.0
        %368 = vmatpush1.msra.mxu0 0.0
        %369 = vmatprep.subr.mxu0 0.0
        %370 = vmatpush1.msra.mxu0 0.0
        %371 = vmatprep.subr.mxu0 0.0
        %372 = vmatpush1.msra.mxu0 0.0
        %373 = vmatprep.subr.mxu0 0.0
        %374 = vmatpush1.msra.mxu0 0.0
        %375 = vmatprep.subr.mxu0 0.0
        %376 = vmatpush1.msra.mxu0 0.0
        %377 = vmatprep.subr.mxu0 0.0
        %378 = vmatpush1.msra.mxu0 0.0
        %379 = vmatprep.subr.mxu0 0.0
        %380 = vmatpush1.msra.mxu0 0.0
        %381 = vmatprep.subr.mxu0 0.0
        %382 = vmatpush1.msra.mxu0 0.0
        %383 = vmatprep.subr.mxu0 0.0
        %384 = vmatpush1.msra.mxu0 0.0
        %385 = vmatprep.subr.mxu0 0.0
        %386 = vmatpush1.msra.mxu0 0.0
        %387 = vmatprep.subr.mxu0 0.0
        %388 = vmatpush1.msra.mxu0 0.0
        %389 = vmatprep.mubr.f32.mxu0 0.0
        %v390 = vand.u32 %v242, 4294901760
        %391 = vmatmul.mubr.f32.gmra.mrb[0].mxu0 %v390
        %v392 = vpop.f32.mrb[0].mxu0
        %v393 = vadd.f32 %v317, %v392
        %v394 = vpop.f32.mrb[0].mxu0
        %395 = vdwg.mxu0
        %396 = vmatprep.subr.mxu0 0.0
        %v397 = vand.u32 %v206, 4294901760
        %v398 = vsub.f32 %v206, %v397
        %399 = vmatpush1.msra.mxu0 %v398
        %400 = vmatprep.subr.mxu0 0.0
        %401 = vmatpush1.msra.mxu0 0.0
        %402 = vmatprep.subr.mxu0 0.0
        %403 = vmatpush1.msra.mxu0 0.0
        %404 = vmatprep.subr.mxu0 0.0
        %405 = vmatpush1.msra.mxu0 0.0
        %406 = vmatprep.subr.mxu0 0.0
        %407 = vmatpush1.msra.mxu0 0.0
        %408 = vmatprep.subr.mxu0 0.0
        %409 = vmatpush1.msra.mxu0 0.0
        %410 = vmatprep.subr.mxu0 0.0
        %411 = vmatpush1.msra.mxu0 0.0
        %412 = vmatprep.subr.mxu0 0.0
        %413 = vmatpush1.msra.mxu0 0.0
        %414 = vmatprep.subr.mxu0 0.0
        %415 = vmatpush1.msra.mxu0 0.0
        %416 = vmatprep.subr.mxu0 0.0
        %417 = vmatpush1.msra.mxu0 0.0
        %418 = vmatprep.subr.mxu0 0.0
        %419 = vmatpush1.msra.mxu0 0.0
        %420 = vmatprep.subr.mxu0 0.0
        %421 = vmatpush1.msra.mxu0 0.0
        %422 = vmatprep.subr.mxu0 0.0
        %423 = vmatpush1.msra.mxu0 0.0
        %424 = vmatprep.subr.mxu0 0.0
        %425 = vmatpush1.msra.mxu0 0.0
        %426 = vmatprep.subr.mxu0 0.0
        %427 = vmatpush1.msra.mxu0 0.0
        %428 = vmatprep.subr.mxu0 0.0
        %429 = vmatpush1.msra.mxu0 0.0
        %430 = vmatprep.subr.mxu0 0.0
        %431 = vmatpush1.msra.mxu0 0.0
        %432 = vmatprep.subr.mxu0 0.0
        %433 = vmatpush1.msra.mxu0 0.0
        %434 = vmatprep.subr.mxu0 0.0
        %435 = vmatpush1.msra.mxu0 0.0
        %436 = vmatprep.subr.mxu0 0.0
        %437 = vmatpush1.msra.mxu0 0.0
        %438 = vmatprep.subr.mxu0 0.0
        %439 = vmatpush1.msra.mxu0 0.0
        %440 = vmatprep.subr.mxu0 0.0
        %441 = vmatpush1.msra.mxu0 0.0
        %442 = vmatprep.subr.mxu0 0.0
        %443 = vmatpush1.msra.mxu0 0.0
        %444 = vmatprep.subr.mxu0 0.0
        %445 = vmatpush1.msra.mxu0 0.0
        %446 = vmatprep.subr.mxu0 0.0
        %447 = vmatpush1.msra.mxu0 0.0
        %448 = vmatprep.subr.mxu0 0.0
        %449 = vmatpush1.msra.mxu0 0.0
        %450 = vmatprep.subr.mxu0 0.0
        %451 = vmatpush1.msra.mxu0 0.0
        %452 = vmatprep.subr.mxu0 0.0
        %453 = vmatpush1.msra.mxu0 0.0
        %454 = vmatprep.subr.mxu0 0.0
        %455 = vmatpush1.msra.mxu0 0.0
        %456 = vmatprep.subr.mxu0 0.0
        %457 = vmatpush1.msra.mxu0 0.0
        %458 = vmatprep.subr.mxu0 0.0
        %459 = vmatpush1.msra.mxu0 0.0
        %460 = vmatprep.subr.mxu0 0.0
        %461 = vmatpush1.msra.mxu0 0.0
        %462 = vmatprep.mubr.f32.mxu0 0.0
        %v463 = vand.u32 %v242, 4294901760
        %v464 = vsub.f32 %v242, %v463
        %465 = vmatmul.mubr.f32.gmra.mrb[0].mxu0 %v464
        %v466 = vpop.f32.mrb[0].mxu0
        %v467 = vadd.f32 %v393, %v466
        %v468 = vpop.f32.mrb[0].mxu0
        %469 = vdwg.mxu0
        %470 = vmatprep.subr.mxu0 0.0
        %v471 = vand.u32 %v206, 4294901760
        %472 = vmatpush1.msra.mxu0 %v471
        %473 = vmatprep.subr.mxu0 0.0
        %474 = vmatpush1.msra.mxu0 0.0
        %475 = vmatprep.subr.mxu0 0.0
        %476 = vmatpush1.msra.mxu0 0.0
        %477 = vmatprep.subr.mxu0 0.0
        %478 = vmatpush1.msra.mxu0 0.0
        %479 = vmatprep.subr.mxu0 0.0
        %480 = vmatpush1.msra.mxu0 0.0
        %481 = vmatprep.subr.mxu0 0.0
        %482 = vmatpush1.msra.mxu0 0.0
        %483 = vmatprep.subr.mxu0 0.0
        %484 = vmatpush1.msra.mxu0 0.0
        %485 = vmatprep.subr.mxu0 0.0
        %486 = vmatpush1.msra.mxu0 0.0
        %487 = vmatprep.subr.mxu0 0.0
        %488 = vmatpush1.msra.mxu0 0.0
        %489 = vmatprep.subr.mxu0 0.0
        %490 = vmatpush1.msra.mxu0 0.0
        %491 = vmatprep.subr.mxu0 0.0
        %492 = vmatpush1.msra.mxu0 0.0
        %493 = vmatprep.subr.mxu0 0.0
        %494 = vmatpush1.msra.mxu0 0.0
        %495 = vmatprep.subr.mxu0 0.0
        %496 = vmatpush1.msra.mxu0 0.0
        %497 = vmatprep.subr.mxu0 0.0
        %498 = vmatpush1.msra.mxu0 0.0
        %499 = vmatprep.subr.mxu0 0.0
        %500 = vmatpush1.msra.mxu0 0.0
        %501 = vmatprep.subr.mxu0 0.0
        %502 = vmatpush1.msra.mxu0 0.0
        %503 = vmatprep.subr.mxu0 0.0
        %504 = vmatpush1.msra.mxu0 0.0
        %505 = vmatprep.subr.mxu0 0.0
        %506 = vmatpush1.msra.mxu0 0.0
        %507 = vmatprep.subr.mxu0 0.0
        %508 = vmatpush1.msra.mxu0 0.0
        %509 = vmatprep.subr.mxu0 0.0
        %510 = vmatpush1.msra.mxu0 0.0
        %511 = vmatprep.subr.mxu0 0.0
        %512 = vmatpush1.msra.mxu0 0.0
        %513 = vmatprep.subr.mxu0 0.0
        %514 = vmatpush1.msra.mxu0 0.0
        %515 = vmatprep.subr.mxu0 0.0
        %516 = vmatpush1.msra.mxu0 0.0
        %517 = vmatprep.subr.mxu0 0.0
        %518 = vmatpush1.msra.mxu0 0.0
        %519 = vmatprep.subr.mxu0 0.0
        %520 = vmatpush1.msra.mxu0 0.0
        %521 = vmatprep.subr.mxu0 0.0
        %522 = vmatpush1.msra.mxu0 0.0
        %523 = vmatprep.subr.mxu0 0.0
        %524 = vmatpush1.msra.mxu0 0.0
        %525 = vmatprep.subr.mxu0 0.0
        %526 = vmatpush1.msra.mxu0 0.0
        %527 = vmatprep.subr.mxu0 0.0
        %528 = vmatpush1.msra.mxu0 0.0
        %529 = vmatprep.subr.mxu0 0.0
        %530 = vmatpush1.msra.mxu0 0.0
        %531 = vmatprep.subr.mxu0 0.0
        %532 = vmatpush1.msra.mxu0 0.0
        %533 = vmatprep.subr.mxu0 0.0
        %534 = vmatpush1.msra.mxu0 0.0
        %535 = vmatprep.mubr.f32.mxu0 0.0
        %v536 = vand.u32 %v242, 4294901760
        %v537 = vsub.f32 %v242, %v536
        %v538 = vand.u32 %v537, 4294901760
        %539 = vmatmul.mubr.f32.gmra.mrb[0].mxu0 %v538
        %v540 = vpop.f32.mrb[0].mxu0
        %v541 = vadd.f32 %v467, %v540
        %v542 = vpop.f32.mrb[0].mxu0
        %543 = vdwg.mxu0
        %544 = vmatprep.subr.mxu0 0.0
        %v545 = vand.u32 %v206, 4294901760
        %v546 = vsub.f32 %v206, %v545
        %v547 = vand.u32 %v546, 4294901760
        %548 = vmatpush1.msra.mxu0 %v547
        %549 = vmatprep.subr.mxu0 0.0
        %550 = vmatpush1.msra.mxu0 0.0
        %551 = vmatprep.subr.mxu0 0.0
        %552 = vmatpush1.msra.mxu0 0.0
        %553 = vmatprep.subr.mxu0 0.0
        %554 = vmatpush1.msra.mxu0 0.0
        %555 = vmatprep.subr.mxu0 0.0
        %556 = vmatpush1.msra.mxu0 0.0
        %557 = vmatprep.subr.mxu0 0.0
        %558 = vmatpush1.msra.mxu0 0.0
        %559 = vmatprep.subr.mxu0 0.0
        %560 = vmatpush1.msra.mxu0 0.0
        %561 = vmatprep.subr.mxu0 0.0
        %562 = vmatpush1.msra.mxu0 0.0
        %563 = vmatprep.subr.mxu0 0.0
        %564 = vmatpush1.msra.mxu0 0.0
        %565 = vmatprep.subr.mxu0 0.0
        %566 = vmatpush1.msra.mxu0 0.0
        %567 = vmatprep.subr.mxu0 0.0
        %568 = vmatpush1.msra.mxu0 0.0
        %569 = vmatprep.subr.mxu0 0.0
        %570 = vmatpush1.msra.mxu0 0.0
        %571 = vmatprep.subr.mxu0 0.0
        %572 = vmatpush1.msra.mxu0 0.0
        %573 = vmatprep.subr.mxu0 0.0
        %574 = vmatpush1.msra.mxu0 0.0
        %575 = vmatprep.subr.mxu0 0.0
        %576 = vmatpush1.msra.mxu0 0.0
        %577 = vmatprep.subr.mxu0 0.0
        %578 = vmatpush1.msra.mxu0 0.0
        %579 = vmatprep.subr.mxu0 0.0
        %580 = vmatpush1.msra.mxu0 0.0
        %581 = vmatprep.subr.mxu0 0.0
        %582 = vmatpush1.msra.mxu0 0.0
        %583 = vmatprep.subr.mxu0 0.0
        %584 = vmatpush1.msra.mxu0 0.0
        %585 = vmatprep.subr.mxu0 0.0
        %586 = vmatpush1.msra.mxu0 0.0
        %587 = vmatprep.subr.mxu0 0.0
        %588 = vmatpush1.msra.mxu0 0.0
        %589 = vmatprep.subr.mxu0 0.0
        %590 = vmatpush1.msra.mxu0 0.0
        %591 = vmatprep.subr.mxu0 0.0
        %592 = vmatpush1.msra.mxu0 0.0
        %593 = vmatprep.subr.mxu0 0.0
        %594 = vmatpush1.msra.mxu0 0.0
        %595 = vmatprep.subr.mxu0 0.0
        %596 = vmatpush1.msra.mxu0 0.0
        %597 = vmatprep.subr.mxu0 0.0
        %598 = vmatpush1.msra.mxu0 0.0
        %599 = vmatprep.subr.mxu0 0.0
        %600 = vmatpush1.msra.mxu0 0.0
        %601 = vmatprep.subr.mxu0 0.0
        %602 = vmatpush1.msra.mxu0 0.0
        %603 = vmatprep.subr.mxu0 0.0
        %604 = vmatpush1.msra.mxu0 0.0
        %605 = vmatprep.subr.mxu0 0.0
        %606 = vmatpush1.msra.mxu0 0.0
        %607 = vmatprep.subr.mxu0 0.0
        %608 = vmatpush1.msra.mxu0 0.0
        %609 = vmatprep.subr.mxu0 0.0
        %610 = vmatpush1.msra.mxu0 0.0
        %611 = vmatprep.mubr.f32.mxu0 0.0
        %v612 = vand.u32 %v242, 4294901760
        %613 = vmatmul.mubr.f32.gmra.mrb[0].mxu0 %v612
        %v614 = vpop.f32.mrb[0].mxu0
        %v615 = vadd.f32 %v541, %v614
        %v616 = vpop.f32.mrb[0].mxu0
        %617 = vdwg.mxu0
        %618 = vmatprep.subr.mxu0 0.0
        %v619 = vand.u32 %v206, 4294901760
        %620 = vmatpush1.msra.mxu0 %v619
        %621 = vmatprep.subr.mxu0 0.0
        %622 = vmatpush1.msra.mxu0 0.0
        %623 = vmatprep.subr.mxu0 0.0
        %624 = vmatpush1.msra.mxu0 0.0
        %625 = vmatprep.subr.mxu0 0.0
        %626 = vmatpush1.msra.mxu0 0.0
        %627 = vmatprep.subr.mxu0 0.0
        %628 = vmatpush1.msra.mxu0 0.0
        %629 = vmatprep.subr.mxu0 0.0
        %630 = vmatpush1.msra.mxu0 0.0
        %631 = vmatprep.subr.mxu0 0.0
        %632 = vmatpush1.msra.mxu0 0.0
        %633 = vmatprep.subr.mxu0 0.0
        %634 = vmatpush1.msra.mxu0 0.0
        %635 = vmatprep.subr.mxu0 0.0
        %636 = vmatpush1.msra.mxu0 0.0
        %637 = vmatprep.subr.mxu0 0.0
        %638 = vmatpush1.msra.mxu0 0.0
        %639 = vmatprep.subr.mxu0 0.0
        %640 = vmatpush1.msra.mxu0 0.0
        %641 = vmatprep.subr.mxu0 0.0
        %642 = vmatpush1.msra.mxu0 0.0
        %643 = vmatprep.subr.mxu0 0.0
        %644 = vmatpush1.msra.mxu0 0.0
        %645 = vmatprep.subr.mxu0 0.0
        %646 = vmatpush1.msra.mxu0 0.0
        %647 = vmatprep.subr.mxu0 0.0
        %648 = vmatpush1.msra.mxu0 0.0
        %649 = vmatprep.subr.mxu0 0.0
        %650 = vmatpush1.msra.mxu0 0.0
        %651 = vmatprep.subr.mxu0 0.0
        %652 = vmatpush1.msra.mxu0 0.0
        %653 = vmatprep.subr.mxu0 0.0
        %654 = vmatpush1.msra.mxu0 0.0
        %655 = vmatprep.subr.mxu0 0.0
        %656 = vmatpush1.msra.mxu0 0.0
        %657 = vmatprep.subr.mxu0 0.0
        %658 = vmatpush1.msra.mxu0 0.0
        %659 = vmatprep.subr.mxu0 0.0
        %660 = vmatpush1.msra.mxu0 0.0
        %661 = vmatprep.subr.mxu0 0.0
        %662 = vmatpush1.msra.mxu0 0.0
        %663 = vmatprep.subr.mxu0 0.0
        %664 = vmatpush1.msra.mxu0 0.0
        %665 = vmatprep.subr.mxu0 0.0
        %666 = vmatpush1.msra.mxu0 0.0
        %667 = vmatprep.subr.mxu0 0.0
        %668 = vmatpush1.msra.mxu0 0.0
        %669 = vmatprep.subr.mxu0 0.0
        %670 = vmatpush1.msra.mxu0 0.0
        %671 = vmatprep.subr.mxu0 0.0
        %672 = vmatpush1.msra.mxu0 0.0
        %673 = vmatprep.subr.mxu0 0.0
        %674 = vmatpush1.msra.mxu0 0.0
        %675 = vmatprep.subr.mxu0 0.0
        %676 = vmatpush1.msra.mxu0 0.0
        %677 = vmatprep.subr.mxu0 0.0
        %678 = vmatpush1.msra.mxu0 0.0
        %679 = vmatprep.subr.mxu0 0.0
        %680 = vmatpush1.msra.mxu0 0.0
        %681 = vmatprep.subr.mxu0 0.0
        %682 = vmatpush1.msra.mxu0 0.0
        %683 = vmatprep.mubr.f32.mxu0 0.0
        %v684 = vand.u32 %v242, 4294901760
        %685 = vmatmul.mubr.f32.gmra.mrb[0].mxu0 %v684
        %v686 = vpop.f32.mrb[0].mxu0
        %v687 = vadd.f32 %v615, %v686
        %v688 = vpop.f32.mrb[0].mxu0
        %689 = vdwg.mxu0
        %v690 = vmul.f32 %v205, %v231
        %691 = vst [vmem:[%s175] sm:$0xff] %v690
        %692 = vst [vmem:[%s175 + $0x8] sm:$0xff] %v687
        %693 = vmatprep.subr.mxu0 0.0
        %v694 = vand.u32 %v222, 4294901760
        %695 = vmatpush1.msra.mxu0 %v694
        %696 = vmatprep.subr.mxu0 0.0
        %697 = vmatpush1.msra.mxu0 0.0
        %698 = vmatprep.subr.mxu0 0.0
        %699 = vmatpush1.msra.mxu0 0.0
        %700 = vmatprep.subr.mxu0 0.0
        %701 = vmatpush1.msra.mxu0 0.0
        %702 = vmatprep.subr.mxu0 0.0
        %703 = vmatpush1.msra.mxu0 0.0
        %704 = vmatprep.subr.mxu0 0.0
        %705 = vmatpush1.msra.mxu0 0.0
        %706 = vmatprep.subr.mxu0 0.0
        %707 = vmatpush1.msra.mxu0 0.0
        %708 = vmatprep.subr.mxu0 0.0
        %709 = vmatpush1.msra.mxu0 0.0
        %710 = vmatprep.subr.mxu0 0.0
        %711 = vmatpush1.msra.mxu0 0.0
        %712 = vmatprep.subr.mxu0 0.0
        %713 = vmatpush1.msra.mxu0 0.0
        %714 = vmatprep.subr.mxu0 0.0
        %715 = vmatpush1.msra.mxu0 0.0
        %716 = vmatprep.subr.mxu0 0.0
        %717 = vmatpush1.msra.mxu0 0.0
        %718 = vmatprep.subr.mxu0 0.0
        %719 = vmatpush1.msra.mxu0 0.0
        %720 = vmatprep.subr.mxu0 0.0
        %721 = vmatpush1.msra.mxu0 0.0
        %722 = vmatprep.subr.mxu0 0.0
        %723 = vmatpush1.msra.mxu0 0.0
        %724 = vmatprep.subr.mxu0 0.0
        %725 = vmatpush1.msra.mxu0 0.0
        %726 = vmatprep.subr.mxu0 0.0
        %727 = vmatpush1.msra.mxu0 0.0
        %728 = vmatprep.subr.mxu0 0.0
        %729 = vmatpush1.msra.mxu0 0.0
        %730 = vmatprep.subr.mxu0 0.0
        %731 = vmatpush1.msra.mxu0 0.0
        %732 = vmatprep.subr.mxu0 0.0
        %733 = vmatpush1.msra.mxu0 0.0
        %734 = vmatprep.subr.mxu0 0.0
        %735 = vmatpush1.msra.mxu0 0.0
        %736 = vmatprep.subr.mxu0 0.0
        %737 = vmatpush1.msra.mxu0 0.0
        %738 = vmatprep.subr.mxu0 0.0
        %739 = vmatpush1.msra.mxu0 0.0
        %740 = vmatprep.subr.mxu0 0.0
        %741 = vmatpush1.msra.mxu0 0.0
        %742 = vmatprep.subr.mxu0 0.0
        %743 = vmatpush1.msra.mxu0 0.0
        %744 = vmatprep.subr.mxu0 0.0
        %745 = vmatpush1.msra.mxu0 0.0
        %746 = vmatprep.subr.mxu0 0.0
        %747 = vmatpush1.msra.mxu0 0.0
        %748 = vmatprep.subr.mxu0 0.0
        %749 = vmatpush1.msra.mxu0 0.0
        %750 = vmatprep.subr.mxu0 0.0
        %751 = vmatpush1.msra.mxu0 0.0
        %752 = vmatprep.subr.mxu0 0.0
        %753 = vmatpush1.msra.mxu0 0.0
        %754 = vmatprep.subr.mxu0 0.0
        %755 = vmatpush1.msra.mxu0 0.0
        %756 = vmatprep.subr.mxu0 0.0
        %757 = vmatpush1.msra.mxu0 0.0
        %758 = vmatprep.mubr.f32.mxu0 0.0
        %v759 = vand.u32 %v242, 4294901760
        %v760 = vsub.f32 %v242, %v759
        %v761 = vand.u32 %v760, 4294901760
        %v762 = vsub.f32 %v760, %v761
        %v763 = vand.u32 %v762, 4294901760
        %764 = vmatmul.mubr.f32.gmra.mrb[0].mxu0 %v763
        %v765 = vpop.f32.mrb[0].mxu0
        %v766 = vadd.f32 0.0, %v765
        %v767 = vpop.f32.mrb[0].mxu0
        %768 = vdwg.mxu0
        %769 = vmatprep.subr.mxu0 0.0
        %v770 = vand.u32 %v222, 4294901760
        %v771 = vsub.f32 %v222, %v770
        %v772 = vand.u32 %v771, 4294901760
        %v773 = vsub.f32 %v771, %v772
        %v774 = vand.u32 %v773, 4294901760
        %775 = vmatpush1.msra.mxu0 %v774
        %776 = vmatprep.subr.mxu0 0.0
        %777 = vmatpush1.msra.mxu0 0.0
        %778 = vmatprep.subr.mxu0 0.0
        %779 = vmatpush1.msra.mxu0 0.0
        %780 = vmatprep.subr.mxu0 0.0
        %781 = vmatpush1.msra.mxu0 0.0
        %782 = vmatprep.subr.mxu0 0.0
        %783 = vmatpush1.msra.mxu0 0.0
        %784 = vmatprep.subr.mxu0 0.0
        %785 = vmatpush1.msra.mxu0 0.0
        %786 = vmatprep.subr.mxu0 0.0
        %787 = vmatpush1.msra.mxu0 0.0
        %788 = vmatprep.subr.mxu0 0.0
        %789 = vmatpush1.msra.mxu0 0.0
        %790 = vmatprep.subr.mxu0 0.0
        %791 = vmatpush1.msra.mxu0 0.0
        %792 = vmatprep.subr.mxu0 0.0
        %793 = vmatpush1.msra.mxu0 0.0
        %794 = vmatprep.subr.mxu0 0.0
        %795 = vmatpush1.msra.mxu0 0.0
        %796 = vmatprep.subr.mxu0 0.0
        %797 = vmatpush1.msra.mxu0 0.0
        %798 = vmatprep.subr.mxu0 0.0
        %799 = vmatpush1.msra.mxu0 0.0
        %800 = vmatprep.subr.mxu0 0.0
        %801 = vmatpush1.msra.mxu0 0.0
        %802 = vmatprep.subr.mxu0 0.0
        %803 = vmatpush1.msra.mxu0 0.0
        %804 = vmatprep.subr.mxu0 0.0
        %805 = vmatpush1.msra.mxu0 0.0
        %806 = vmatprep.subr.mxu0 0.0
        %807 = vmatpush1.msra.mxu0 0.0
        %808 = vmatprep.subr.mxu0 0.0
        %809 = vmatpush1.msra.mxu0 0.0
        %810 = vmatprep.subr.mxu0 0.0
        %811 = vmatpush1.msra.mxu0 0.0
        %812 = vmatprep.subr.mxu0 0.0
        %813 = vmatpush1.msra.mxu0 0.0
        %814 = vmatprep.subr.mxu0 0.0
        %815 = vmatpush1.msra.mxu0 0.0
        %816 = vmatprep.subr.mxu0 0.0
        %817 = vmatpush1.msra.mxu0 0.0
        %818 = vmatprep.subr.mxu0 0.0
        %819 = vmatpush1.msra.mxu0 0.0
        %820 = vmatprep.subr.mxu0 0.0
        %821 = vmatpush1.msra.mxu0 0.0
        %822 = vmatprep.subr.mxu0 0.0
        %823 = vmatpush1.msra.mxu0 0.0
        %824 = vmatprep.subr.mxu0 0.0
        %825 = vmatpush1.msra.mxu0 0.0
        %826 = vmatprep.subr.mxu0 0.0
        %827 = vmatpush1.msra.mxu0 0.0
        %828 = vmatprep.subr.mxu0 0.0
        %829 = vmatpush1.msra.mxu0 0.0
        %830 = vmatprep.subr.mxu0 0.0
        %831 = vmatpush1.msra.mxu0 0.0
        %832 = vmatprep.subr.mxu0 0.0
        %833 = vmatpush1.msra.mxu0 0.0
        %834 = vmatprep.subr.mxu0 0.0
        %835 = vmatpush1.msra.mxu0 0.0
        %836 = vmatprep.subr.mxu0 0.0
        %837 = vmatpush1.msra.mxu0 0.0
        %838 = vmatprep.mubr.f32.mxu0 0.0
        %v839 = vand.u32 %v242, 4294901760
        %840 = vmatmul.mubr.f32.gmra.mrb[0].mxu0 %v839
        %v841 = vpop.f32.mrb[0].mxu0
        %v842 = vadd.f32 %v766, %v841
        %v843 = vpop.f32.mrb[0].mxu0
        %844 = vdwg.mxu0
        %845 = vmatprep.subr.mxu0 0.0
        %v846 = vand.u32 %v222, 4294901760
        %v847 = vsub.f32 %v222, %v846
        %848 = vmatpush1.msra.mxu0 %v847
        %849 = vmatprep.subr.mxu0 0.0
        %850 = vmatpush1.msra.mxu0 0.0
        %851 = vmatprep.subr.mxu0 0.0
        %852 = vmatpush1.msra.mxu0 0.0
        %853 = vmatprep.subr.mxu0 0.0
        %854 = vmatpush1.msra.mxu0 0.0
        %855 = vmatprep.subr.mxu0 0.0
        %856 = vmatpush1.msra.mxu0 0.0
        %857 = vmatprep.subr.mxu0 0.0
        %858 = vmatpush1.msra.mxu0 0.0
        %859 = vmatprep.subr.mxu0 0.0
        %860 = vmatpush1.msra.mxu0 0.0
        %861 = vmatprep.subr.mxu0 0.0
        %862 = vmatpush1.msra.mxu0 0.0
        %863 = vmatprep.subr.mxu0 0.0
        %864 = vmatpush1.msra.mxu0 0.0
        %865 = vmatprep.subr.mxu0 0.0
        %866 = vmatpush1.msra.mxu0 0.0
        %867 = vmatprep.subr.mxu0 0.0
        %868 = vmatpush1.msra.mxu0 0.0
        %869 = vmatprep.subr.mxu0 0.0
        %870 = vmatpush1.msra.mxu0 0.0
        %871 = vmatprep.subr.mxu0 0.0
        %872 = vmatpush1.msra.mxu0 0.0
        %873 = vmatprep.subr.mxu0 0.0
        %874 = vmatpush1.msra.mxu0 0.0
        %875 = vmatprep.subr.mxu0 0.0
        %876 = vmatpush1.msra.mxu0 0.0
        %877 = vmatprep.subr.mxu0 0.0
        %878 = vmatpush1.msra.mxu0 0.0
        %879 = vmatprep.subr.mxu0 0.0
        %880 = vmatpush1.msra.mxu0 0.0
        %881 = vmatprep.subr.mxu0 0.0
        %882 = vmatpush1.msra.mxu0 0.0
        %883 = vmatprep.subr.mxu0 0.0
        %884 = vmatpush1.msra.mxu0 0.0
        %885 = vmatprep.subr.mxu0 0.0
        %886 = vmatpush1.msra.mxu0 0.0
        %887 = vmatprep.subr.mxu0 0.0
        %888 = vmatpush1.msra.mxu0 0.0
        %889 = vmatprep.subr.mxu0 0.0
        %890 = vmatpush1.msra.mxu0 0.0
        %891 = vmatprep.subr.mxu0 0.0
        %892 = vmatpush1.msra.mxu0 0.0
        %893 = vmatprep.subr.mxu0 0.0
        %894 = vmatpush1.msra.mxu0 0.0
        %895 = vmatprep.subr.mxu0 0.0
        %896 = vmatpush1.msra.mxu0 0.0
        %897 = vmatprep.subr.mxu0 0.0
        %898 = vmatpush1.msra.mxu0 0.0
        %899 = vmatprep.subr.mxu0 0.0
        %900 = vmatpush1.msra.mxu0 0.0
        %901 = vmatprep.subr.mxu0 0.0
        %902 = vmatpush1.msra.mxu0 0.0
        %903 = vmatprep.subr.mxu0 0.0
        %904 = vmatpush1.msra.mxu0 0.0
        %905 = vmatprep.subr.mxu0 0.0
        %906 = vmatpush1.msra.mxu0 0.0
        %907 = vmatprep.subr.mxu0 0.0
        %908 = vmatpush1.msra.mxu0 0.0
        %909 = vmatprep.subr.mxu0 0.0
        %910 = vmatpush1.msra.mxu0 0.0
        %911 = vmatprep.mubr.f32.mxu0 0.0
        %v912 = vand.u32 %v242, 4294901760
        %v913 = vsub.f32 %v242, %v912
        %914 = vmatmul.mubr.f32.gmra.mrb[0].mxu0 %v913
        %v915 = vpop.f32.mrb[0].mxu0
        %v916 = vadd.f32 %v842, %v915
        %v917 = vpop.f32.mrb[0].mxu0
        %918 = vdwg.mxu0
        %919 = vmatprep.subr.mxu0 0.0
        %v920 = vand.u32 %v222, 4294901760
        %921 = vmatpush1.msra.mxu0 %v920
        %922 = vmatprep.subr.mxu0 0.0
        %923 = vmatpush1.msra.mxu0 0.0
        %924 = vmatprep.subr.mxu0 0.0
        %925 = vmatpush1.msra.mxu0 0.0
        %926 = vmatprep.subr.mxu0 0.0
        %927 = vmatpush1.msra.mxu0 0.0
        %928 = vmatprep.subr.mxu0 0.0
        %929 = vmatpush1.msra.mxu0 0.0
        %930 = vmatprep.subr.mxu0 0.0
        %931 = vmatpush1.msra.mxu0 0.0
        %932 = vmatprep.subr.mxu0 0.0
        %933 = vmatpush1.msra.mxu0 0.0
        %934 = vmatprep.subr.mxu0 0.0
        %935 = vmatpush1.msra.mxu0 0.0
        %936 = vmatprep.subr.mxu0 0.0
        %937 = vmatpush1.msra.mxu0 0.0
        %938 = vmatprep.subr.mxu0 0.0
        %939 = vmatpush1.msra.mxu0 0.0
        %940 = vmatprep.subr.mxu0 0.0
        %941 = vmatpush1.msra.mxu0 0.0
        %942 = vmatprep.subr.mxu0 0.0
        %943 = vmatpush1.msra.mxu0 0.0
        %944 = vmatprep.subr.mxu0 0.0
        %945 = vmatpush1.msra.mxu0 0.0
        %946 = vmatprep.subr.mxu0 0.0
        %947 = vmatpush1.msra.mxu0 0.0
        %948 = vmatprep.subr.mxu0 0.0
        %949 = vmatpush1.msra.mxu0 0.0
        %950 = vmatprep.subr.mxu0 0.0
        %951 = vmatpush1.msra.mxu0 0.0
        %952 = vmatprep.subr.mxu0 0.0
        %953 = vmatpush1.msra.mxu0 0.0
        %954 = vmatprep.subr.mxu0 0.0
        %955 = vmatpush1.msra.mxu0 0.0
        %956 = vmatprep.subr.mxu0 0.0
        %957 = vmatpush1.msra.mxu0 0.0
        %958 = vmatprep.subr.mxu0 0.0
        %959 = vmatpush1.msra.mxu0 0.0
        %960 = vmatprep.subr.mxu0 0.0
        %961 = vmatpush1.msra.mxu0 0.0
        %962 = vmatprep.subr.mxu0 0.0
        %963 = vmatpush1.msra.mxu0 0.0
        %964 = vmatprep.subr.mxu0 0.0
        %965 = vmatpush1.msra.mxu0 0.0
        %966 = vmatprep.subr.mxu0 0.0
        %967 = vmatpush1.msra.mxu0 0.0
        %968 = vmatprep.subr.mxu0 0.0
        %969 = vmatpush1.msra.mxu0 0.0
        %970 = vmatprep.subr.mxu0 0.0
        %971 = vmatpush1.msra.mxu0 0.0
        %972 = vmatprep.subr.mxu0 0.0
        %973 = vmatpush1.msra.mxu0 0.0
        %974 = vmatprep.subr.mxu0 0.0
        %975 = vmatpush1.msra.mxu0 0.0
        %976 = vmatprep.subr.mxu0 0.0
        %977 = vmatpush1.msra.mxu0 0.0
        %978 = vmatprep.subr.mxu0 0.0
        %979 = vmatpush1.msra.mxu0 0.0
        %980 = vmatprep.subr.mxu0 0.0
        %981 = vmatpush1.msra.mxu0 0.0
        %982 = vmatprep.subr.mxu0 0.0
        %983 = vmatpush1.msra.mxu0 0.0
        %984 = vmatprep.mubr.f32.mxu0 0.0
        %v985 = vand.u32 %v242, 4294901760
        %v986 = vsub.f32 %v242, %v985
        %v987 = vand.u32 %v986, 4294901760
        %988 = vmatmul.mubr.f32.gmra.mrb[0].mxu0 %v987
        %v989 = vpop.f32.mrb[0].mxu0
        %v990 = vadd.f32 %v916, %v989
        %v991 = vpop.f32.mrb[0].mxu0
        %992 = vdwg.mxu0
        %993 = vmatprep.subr.mxu0 0.0
        %v994 = vand.u32 %v222, 4294901760
        %v995 = vsub.f32 %v222, %v994
        %v996 = vand.u32 %v995, 4294901760
        %997 = vmatpush1.msra.mxu0 %v996
        %998 = vmatprep.subr.mxu0 0.0
        %999 = vmatpush1.msra.mxu0 0.0
        %1000 = vmatprep.subr.mxu0 0.0
        %1001 = vmatpush1.msra.mxu0 0.0
        %1002 = vmatprep.subr.mxu0 0.0
        %1003 = vmatpush1.msra.mxu0 0.0
        %1004 = vmatprep.subr.mxu0 0.0
        %1005 = vmatpush1.msra.mxu0 0.0
        %1006 = vmatprep.subr.mxu0 0.0
        %1007 = vmatpush1.msra.mxu0 0.0
        %1008 = vmatprep.subr.mxu0 0.0
        %1009 = vmatpush1.msra.mxu0 0.0
        %1010 = vmatprep.subr.mxu0 0.0
        %1011 = vmatpush1.msra.mxu0 0.0
        %1012 = vmatprep.subr.mxu0 0.0
        %1013 = vmatpush1.msra.mxu0 0.0
        %1014 = vmatprep.subr.mxu0 0.0
        %1015 = vmatpush1.msra.mxu0 0.0
        %1016 = vmatprep.subr.mxu0 0.0
        %1017 = vmatpush1.msra.mxu0 0.0
        %1018 = vmatprep.subr.mxu0 0.0
        %1019 = vmatpush1.msra.mxu0 0.0
        %1020 = vmatprep.subr.mxu0 0.0
        %1021 = vmatpush1.msra.mxu0 0.0
        %1022 = vmatprep.subr.mxu0 0.0
        %1023 = vmatpush1.msra.mxu0 0.0
        %1024 = vmatprep.subr.mxu0 0.0
        %1025 = vmatpush1.msra.mxu0 0.0
        %1026 = vmatprep.subr.mxu0 0.0
        %1027 = vmatpush1.msra.mxu0 0.0
        %1028 = vmatprep.subr.mxu0 0.0
        %1029 = vmatpush1.msra.mxu0 0.0
        %1030 = vmatprep.subr.mxu0 0.0
        %1031 = vmatpush1.msra.mxu0 0.0
        %1032 = vmatprep.subr.mxu0 0.0
        %1033 = vmatpush1.msra.mxu0 0.0
        %1034 = vmatprep.subr.mxu0 0.0
        %1035 = vmatpush1.msra.mxu0 0.0
        %1036 = vmatprep.subr.mxu0 0.0
        %1037 = vmatpush1.msra.mxu0 0.0
        %1038 = vmatprep.subr.mxu0 0.0
        %1039 = vmatpush1.msra.mxu0 0.0
        %1040 = vmatprep.subr.mxu0 0.0
        %1041 = vmatpush1.msra.mxu0 0.0
        %1042 = vmatprep.subr.mxu0 0.0
        %1043 = vmatpush1.msra.mxu0 0.0
        %1044 = vmatprep.subr.mxu0 0.0
        %1045 = vmatpush1.msra.mxu0 0.0
        %1046 = vmatprep.subr.mxu0 0.0
        %1047 = vmatpush1.msra.mxu0 0.0
        %1048 = vmatprep.subr.mxu0 0.0
        %1049 = vmatpush1.msra.mxu0 0.0
        %1050 = vmatprep.subr.mxu0 0.0
        %1051 = vmatpush1.msra.mxu0 0.0
        %1052 = vmatprep.subr.mxu0 0.0
        %1053 = vmatpush1.msra.mxu0 0.0
        %1054 = vmatprep.subr.mxu0 0.0
        %1055 = vmatpush1.msra.mxu0 0.0
        %1056 = vmatprep.subr.mxu0 0.0
        %1057 = vmatpush1.msra.mxu0 0.0
        %1058 = vmatprep.subr.mxu0 0.0
        %1059 = vmatpush1.msra.mxu0 0.0
        %1060 = vmatprep.mubr.f32.mxu0 0.0
        %v1061 = vand.u32 %v242, 4294901760
        %1062 = vmatmul.mubr.f32.gmra.mrb[0].mxu0 %v1061
        %v1063 = vpop.f32.mrb[0].mxu0
        %v1064 = vadd.f32 %v990, %v1063
        %v1065 = vpop.f32.mrb[0].mxu0
        %1066 = vdwg.mxu0
        %1067 = vmatprep.subr.mxu0 0.0
        %v1068 = vand.u32 %v222, 4294901760
        %1069 = vmatpush1.msra.mxu0 %v1068
        %1070 = vmatprep.subr.mxu0 0.0
        %1071 = vmatpush1.msra.mxu0 0.0
        %1072 = vmatprep.subr.mxu0 0.0
        %1073 = vmatpush1.msra.mxu0 0.0
        %1074 = vmatprep.subr.mxu0 0.0
        %1075 = vmatpush1.msra.mxu0 0.0
        %1076 = vmatprep.subr.mxu0 0.0
        %1077 = vmatpush1.msra.mxu0 0.0
        %1078 = vmatprep.subr.mxu0 0.0
        %1079 = vmatpush1.msra.mxu0 0.0
        %1080 = vmatprep.subr.mxu0 0.0
        %1081 = vmatpush1.msra.mxu0 0.0
        %1082 = vmatprep.subr.mxu0 0.0
        %1083 = vmatpush1.msra.mxu0 0.0
        %1084 = vmatprep.subr.mxu0 0.0
        %1085 = vmatpush1.msra.mxu0 0.0
        %1086 = vmatprep.subr.mxu0 0.0
        %1087 = vmatpush1.msra.mxu0 0.0
        %1088 = vmatprep.subr.mxu0 0.0
        %1089 = vmatpush1.msra.mxu0 0.0
        %1090 = vmatprep.subr.mxu0 0.0
        %1091 = vmatpush1.msra.mxu0 0.0
        %1092 = vmatprep.subr.mxu0 0.0
        %1093 = vmatpush1.msra.mxu0 0.0
        %1094 = vmatprep.subr.mxu0 0.0
        %1095 = vmatpush1.msra.mxu0 0.0
        %1096 = vmatprep.subr.mxu0 0.0
        %1097 = vmatpush1.msra.mxu0 0.0
        %1098 = vmatprep.subr.mxu0 0.0
        %1099 = vmatpush1.msra.mxu0 0.0
        %1100 = vmatprep.subr.mxu0 0.0
        %1101 = vmatpush1.msra.mxu0 0.0
        %1102 = vmatprep.subr.mxu0 0.0
        %1103 = vmatpush1.msra.mxu0 0.0
        %1104 = vmatprep.subr.mxu0 0.0
        %1105 = vmatpush1.msra.mxu0 0.0
        %1106 = vmatprep.subr.mxu0 0.0
        %1107 = vmatpush1.msra.mxu0 0.0
        %1108 = vmatprep.subr.mxu0 0.0
        %1109 = vmatpush1.msra.mxu0 0.0
        %1110 = vmatprep.subr.mxu0 0.0
        %1111 = vmatpush1.msra.mxu0 0.0
        %1112 = vmatprep.subr.mxu0 0.0
        %1113 = vmatpush1.msra.mxu0 0.0
        %1114 = vmatprep.subr.mxu0 0.0
        %1115 = vmatpush1.msra.mxu0 0.0
        %1116 = vmatprep.subr.mxu0 0.0
        %1117 = vmatpush1.msra.mxu0 0.0
        %1118 = vmatprep.subr.mxu0 0.0
        %1119 = vmatpush1.msra.mxu0 0.0
        %1120 = vmatprep.subr.mxu0 0.0
        %1121 = vmatpush1.msra.mxu0 0.0
        %1122 = vmatprep.subr.mxu0 0.0
        %1123 = vmatpush1.msra.mxu0 0.0
        %1124 = vmatprep.subr.mxu0 0.0
        %1125 = vmatpush1.msra.mxu0 0.0
        %1126 = vmatprep.subr.mxu0 0.0
        %1127 = vmatpush1.msra.mxu0 0.0
        %1128 = vmatprep.subr.mxu0 0.0
        %1129 = vmatpush1.msra.mxu0 0.0
        %1130 = vmatprep.subr.mxu0 0.0
        %1131 = vmatpush1.msra.mxu0 0.0
        %1132 = vmatprep.mubr.f32.mxu0 0.0
        %v1133 = vand.u32 %v242, 4294901760
        %1134 = vmatmul.mubr.f32.gmra.mrb[0].mxu0 %v1133
        %v1135 = vpop.f32.mrb[0].mxu0
        %v1136 = vadd.f32 %v1064, %v1135
        %v1137 = vpop.f32.mrb[0].mxu0
        %1138 = vdwg.mxu0
        %v1139 = vmul.f32 %v221, %v231
        %1140 = vst [vmem:[%s182] sm:$0xff] %v1139
        %1141 = vst [vmem:[%s182 + $0x8] sm:$0xff] %v1136
        %s1142 = sand.u32 %s67, 1
        %s1143 = scalar_lea.sflag [#allocation7], %s1142
        %s1144 = sand.u32 %s67, 1
        %s1145 = smul.addr %s1144, 16
        %s1146 = scalar_lea.vmem [#allocation8], %s1145
        %s1147 = sand.u32 %s93, 1
        %s1148 = scalar_lea.sflag [#allocation10], %s1147
        %s1149 = sand.u32 %s93, 1
        %s1150 = smul.addr %s1149, 16
        %s1151 = scalar_lea.vmem [#allocation9], %s1150
        // Predicated region
        $region29: #{tpu_custom_call.1} parent=23 // pred_check
          %p1152 = pneg %p77
        $region30: #{tpu_custom_call.1} parent=23 // pred_check_branch
          %1154 = sbr.rel (%p1152) target = $region32
        $region31: #{tpu_custom_call.1} parent=23 // pred_region
          %s1156 = ssub.s32 256, 256
          %1157 = vsyncadd %s1143, %s1156
          %s1158 = smul.addr %s33, 2
          %s1159 = smul.addr %s1158, 128
          %s1160 = scalar_lea.hbm %s3, %s1159
          %s1162 = sshll.u32 %s1146, 4
          %s1163 = int_to_ptr.vmem [resolvable:$true] %s1162
          %1165 = dma.vmem_to_hbm [thread:$0]  %s1163, 256, %s1160, %s1143
        $region32: #{tpu_custom_call.1} parent=23 // pred_fallthru
          _
        // Predicated region
        $region33: #{tpu_custom_call.1} parent=23 // pred_check
          %p1166 = pneg %p103
        $region34: #{tpu_custom_call.1} parent=23 // pred_check_branch
          %1168 = sbr.rel (%p1166) target = $region36
        $region35: #{tpu_custom_call.1} parent=23 // pred_region
          %s1170 = ssub.s32 256, 256
          %1171 = vsyncadd %s1148, %s1170
          %s1172 = smul.addr %s33, 2
          %s1173 = smul.addr %s1172, 128
          %s1174 = scalar_lea.hbm %s4, %s1173
          %s1176 = sshll.u32 %s1151, 4
          %s1177 = int_to_ptr.vmem [resolvable:$true] %s1176
          %1179 = dma.vmem_to_hbm [thread:$0]  %s1177, 256, %s1174, %s1148
        $region36: #{tpu_custom_call.1} parent=23 // pred_fallthru
          _
      $region24: #{tpu_custom_call.1} parent=5 // pred_fallthru
        _
      %p1180 = scmp.le.s32.totalorder 2, %s28
      // Predicated region
      $region37: #{tpu_custom_call.1} parent=5 // pred_check
        %p1181 = pneg %p1180
      $region38: #{tpu_custom_call.1} parent=5 // pred_check_branch
        %1183 = sbr.rel (%p1181) target = $region40
      $region39: #{tpu_custom_call.1} parent=5 // pred_region
        %s1184 = ssub.s32 %s28, 2
        // Predicated region
        $region41: #{tpu_custom_call.1} parent=39 // pred_check
          %p1185 = pneg %p83
        $region42: #{tpu_custom_call.1} parent=39 // pred_check_branch
          %1187 = sbr.rel (%p1185) target = $region44
        $region43: #{tpu_custom_call.1} parent=39 // pred_region
          %s1188 = sand.u32 %s68, 1
          %s1189 = scalar_lea.sflag [#allocation7], %s1188
          %s1190 = sand.u32 %s68, 1
          %s1191 = smul.addr %s1190, 16
          %s1192 = scalar_lea.vmem [#allocation8], %s1191
          %1193 = dma.done %s1189, 256
        $region44: #{tpu_custom_call.1} parent=39 // pred_fallthru
          _
        // Predicated region
        $region45: #{tpu_custom_call.1} parent=39 // pred_check
          %p1194 = pneg %p109
        $region46: #{tpu_custom_call.1} parent=39 // pred_check_branch
          %1196 = sbr.rel (%p1194) target = $region48
        $region47: #{tpu_custom_call.1} parent=39 // pred_region
          %s1197 = sand.u32 %s94, 1
          %s1198 = scalar_lea.sflag [#allocation10], %s1197
          %s1199 = sand.u32 %s94, 1
          %s1200 = smul.addr %s1199, 16
          %s1201 = scalar_lea.vmem [#allocation9], %s1200
          %1202 = dma.done %s1198, 256
        $region48: #{tpu_custom_call.1} parent=39 // pred_fallthru
          _
      $region40: #{tpu_custom_call.1} parent=5 // pred_fallthru
        _
    $region6: #{tpu_custom_call.1} parent=1 // loop_footer
      %s32 = sadd.s32 1, %s28
    $region7: #{tpu_custom_call.1} parent=1 // loop_footer_branch
      %27 = sbr.rel target = $region3
    $region8: #{tpu_custom_call.1} parent=1 // loop_exit
      _
    %1203 = vsyncpa [#allocation6], 1
    %s1204 = scalar_lea.sflag [#allocation6], 1
    %1205 = vsyncpa %s1204, 1
    %1206 = vsyncpa [#allocation7], 1
    %s1207 = scalar_lea.sflag [#allocation7], 1
    %1208 = vsyncpa %s1207, 1
    %1209 = vsyncpa [#allocation10], 1
    %s1210 = scalar_lea.sflag [#allocation10], 1
    %1211 = vsyncpa %s1210, 1

</llo_original>
